<compile_context>
chip_gen: v7x
topology: tpu7x:2x2x1
jax: 0.10.0
libtpu: 0.0.40
codegen_flags: <defaults>
</compile_context>

<pallas_src>
import functools

import jax
import jax.numpy as jnp
from jax.experimental import pallas as pl
from jax.experimental.pallas import tpu as pltpu


def _decoder_kernel(
    x_ref,
    # fused layer-1 (robot | hidden) params
    w1_ref, b1_ref,
    # get_robot branch params (layer 2, padded layer 3)
    w2r_ref, b2r_ref, w3r_ref, b3r_ref,
    # get_hidden_state branch params (layer 2, layer 3)
    w2h_ref, b2h_ref, w3h_ref, b3h_ref,
    # outputs
    robot_ref, hidden_ref,
):
    D = x_ref.shape[1]

    # Cast activations to bf16 at the MXU input; accumulate in f32 and do the
    # bias-add / ReLU epilogue in f32 (works on v5e too, no bf16 VPU needed).
    x_bf = x_ref[...].astype(jnp.bfloat16)

    # ---- fused layer 1 for both branches: x @ [W1r | W1h] + [b1r | b1h] ----
    hg = jnp.dot(x_bf, w1_ref[...], preferred_element_type=jnp.float32)
    hg = jnp.maximum(hg + b1_ref[...], 0.0)
    h = hg[:, :D]      # robot branch activations
    g = hg[:, D:]      # hidden-state branch activations

    # ---- get_robot: ReLU(h @ W2r + b2r) @ W3r_pad + b3r_pad ----
    h = jnp.dot(h.astype(jnp.bfloat16), w2r_ref[...],
                preferred_element_type=jnp.float32)
    h = jnp.maximum(h + b2r_ref[...], 0.0)
    robot = jnp.dot(h.astype(jnp.bfloat16), w3r_ref[...],
                    preferred_element_type=jnp.float32) + b3r_ref[...]
    robot_ref[...] = robot.astype(robot_ref.dtype)   # lane-dense (B, 128) store

    # ---- get_hidden_state: ReLU(g @ W2h + b2h) @ W3h + b3h ----
    g = jnp.dot(g.astype(jnp.bfloat16), w2h_ref[...],
                preferred_element_type=jnp.float32)
    g = jnp.maximum(g + b2h_ref[...], 0.0)
    hidden = jnp.dot(g.astype(jnp.bfloat16), w3h_ref[...],
                     preferred_element_type=jnp.float32) + b3h_ref[...]
    hidden_ref[...] = hidden.astype(hidden_ref.dtype)


_ROBOT_PAD_N = 128  # lane-dense padded width for the N=5 robot head


@functools.partial(jax.jit, static_argnames=("output_size",))
def decoder_forward(x, params, output_size=5):
    """Runs the full Decoder forward pass in a single Pallas kernel.

    x: (B, input_size) float32
    params: dict of f32 weights/biases (see init_decoder_params)
    returns: (robot (B, output_size), hidden_state (B, input_size))
    """
    B, D = x.shape

    # --- wrapper-side param prep (pure layout plumbing, fused by XLA) ---
    # Fused layer 1: (D, 2D) bf16 weight, (1, 2D) f32 bias.
    w1_cat = jnp.concatenate([params["w1r"], params["w1h"]], axis=1)
    b1_cat = jnp.concatenate([params["b1r"], params["b1h"]], axis=1)
    # Robot head padded from N=output_size to N=128 (zeros in padded lanes).
    w3r_pad = jnp.zeros((D, _ROBOT_PAD_N), jnp.float32)
    w3r_pad = w3r_pad.at[:, :output_size].set(params["w3r"])
    b3r_pad = jnp.zeros((1, _ROBOT_PAD_N), jnp.float32)
    b3r_pad = b3r_pad.at[:, :output_size].set(params["b3r"])

    bf16 = lambda a: a.astype(jnp.bfloat16)
    args = (
        x,
        bf16(w1_cat), b1_cat,
        bf16(params["w2r"]), params["b2r"], bf16(w3r_pad), b3r_pad,
        bf16(params["w2h"]), params["b2h"], bf16(params["w3h"]), params["b3h"],
    )

    flops = 2 * B * D * (2 * D + D + _ROBOT_PAD_N + D + D)
    bytes_accessed = sum(int(a.size * a.dtype.itemsize) for a in args)
    bytes_accessed += B * _ROBOT_PAD_N * 4 + B * D * 4  # outputs

    vmem = pl.BlockSpec(memory_space=pltpu.MemorySpace.VMEM)
    robot_pad, hidden = pl.pallas_call(
        _decoder_kernel,
        out_shape=(
            jax.ShapeDtypeStruct((B, _ROBOT_PAD_N), jnp.float32),
            jax.ShapeDtypeStruct((B, D), jnp.float32),
        ),
        in_specs=[vmem] * len(args),
        out_specs=(vmem, vmem),
        cost_estimate=pl.CostEstimate(
            flops=flops, transcendentals=0, bytes_accessed=bytes_accessed),
    )(*args)

    # Slice the padded robot head back to (B, output_size) in the wrapper.
    return robot_pad[:, :output_size], hidden
    # TODO(synk): if batch ever grows >~128, add a "parallel" batch grid axis
    # (tiles of 128/256 rows) to use both TensorCores on v7x.


def init_decoder_params(key, input_size=256, output_size=5):
    """Deterministic PyTorch-Linear-style init: U(-1/sqrt(fan_in), 1/sqrt(fan_in)).

    Weights stored as (in, out) so the kernel does x @ W + b.
    """
    def linear(k, fan_in, fan_out):
        kw, kb = jax.random.split(k)
        bound = 1.0 / jnp.sqrt(jnp.float32(fan_in))
        w = jax.random.uniform(kw, (fan_in, fan_out), jnp.float32, -bound, bound)
        b = jax.random.uniform(kb, (1, fan_out), jnp.float32, -bound, bound)
        return w, b

    keys = jax.random.split(key, 6)
    w1r, b1r = linear(keys[0], input_size, input_size)
    w2r, b2r = linear(keys[1], input_size, input_size)
    w3r, b3r = linear(keys[2], input_size, output_size)
    w1h, b1h = linear(keys[3], input_size, input_size)
    w2h, b2h = linear(keys[4], input_size, input_size)
    w3h, b3h = linear(keys[5], input_size, input_size)
    return dict(
        w1r=w1r, b1r=b1r, w2r=w2r, b2r=b2r, w3r=w3r, b3r=b3r,
        w1h=w1h, b1h=b1h, w2h=w2h, b2h=b2h, w3h=w3h, b3h=b3h,
    )


def decoder_reference_f32(x, p):
    """Pure-f32 JAX reference (matches the PyTorch module exactly)."""
    h = jnp.maximum(x @ p["w1r"] + p["b1r"], 0.0)
    h = jnp.maximum(h @ p["w2r"] + p["b2r"], 0.0)
    robot = h @ p["w3r"] + p["b3r"]
    g = jnp.maximum(x @ p["w1h"] + p["b1h"], 0.0)
    g = jnp.maximum(g @ p["w2h"] + p["b2h"], 0.0)
    hidden = g @ p["w3h"] + p["b3h"]
    return robot, hidden


def decoder_reference_bf16(x, p):
    """Reference with bf16 dot inputs / f32 accumulation (mirrors the kernel)."""
    def mm(a, w):
        return jnp.dot(a.astype(jnp.bfloat16), w.astype(jnp.bfloat16),
                       preferred_element_type=jnp.float32)
    h = jnp.maximum(mm(x, p["w1r"]) + p["b1r"], 0.0)
    h = jnp.maximum(mm(h, p["w2r"]) + p["b2r"], 0.0)
    robot = mm(h, p["w3r"]) + p["b3r"]
    g = jnp.maximum(mm(x, p["w1h"]) + p["b1h"], 0.0)
    g = jnp.maximum(mm(g, p["w2h"]) + p["b2h"], 0.0)
    hidden = mm(g, p["w3h"]) + p["b3h"]
    return robot, hidden


if __name__ == "__main__":
    INPUT_SIZE = 256
    OUTPUT_SIZE = 5
    BATCH = 8

    key = jax.random.PRNGKey(0)
    k_params, k_x = jax.random.split(key)
    params = init_decoder_params(k_params, INPUT_SIZE, OUTPUT_SIZE)
    x = jax.random.normal(k_x, (BATCH, INPUT_SIZE), jnp.float32)

    robot, hidden = decoder_forward(x, params, output_size=OUTPUT_SIZE)
    jax.block_until_ready((robot, hidden))

    assert robot.shape == (BATCH, OUTPUT_SIZE)
    assert hidden.shape == (BATCH, INPUT_SIZE)

    # Tight check vs. a matching bf16-input / f32-accum reference.
    robot_bf, hidden_bf = decoder_reference_bf16(x, params)
    assert jnp.allclose(robot, robot_bf, atol=5e-3, rtol=5e-3)
    assert jnp.allclose(hidden, hidden_bf, atol=5e-3, rtol=5e-3)

    # Looser check vs. the exact f32 reference (bf16 weight quantization noise).
    robot_f32, hidden_f32 = decoder_reference_f32(x, params)
    assert jnp.allclose(robot, robot_f32, atol=3e-2, rtol=3e-2)
    assert jnp.allclose(hidden, hidden_f32, atol=3e-2, rtol=3e-2)

    print("KERNEL_OK")
</pallas_src>

<mosaic_0001>
module attributes {stable_mosaic.version = 11 : i64} {
  func.func @_decoder_kernel(%arg0: memref<8x256xf32, #tpu.memory_space<vmem>>, %arg1: memref<256x512xbf16, #tpu.memory_space<vmem>>, %arg2: memref<1x512xf32, #tpu.memory_space<vmem>>, %arg3: memref<256x256xbf16, #tpu.memory_space<vmem>>, %arg4: memref<1x256xf32, #tpu.memory_space<vmem>>, %arg5: memref<256x128xbf16, #tpu.memory_space<vmem>>, %arg6: memref<1x128xf32, #tpu.memory_space<vmem>>, %arg7: memref<256x256xbf16, #tpu.memory_space<vmem>>, %arg8: memref<1x256xf32, #tpu.memory_space<vmem>>, %arg9: memref<256x256xbf16, #tpu.memory_space<vmem>>, %arg10: memref<1x256xf32, #tpu.memory_space<vmem>>, %arg11: memref<8x128xf32, #tpu.memory_space<vmem>>, %arg12: memref<8x256xf32, #tpu.memory_space<vmem>>) attributes {dimension_semantics = [], scalar_prefetch = 0 : i64, scratch_operands = 0 : i64, tpu.core_type = #tpu.core_type<tc>} {
    %c0 = arith.constant 0 : index
    %c0_0 = arith.constant 0 : index
    %0 = vector.load %arg0[%c0, %c0_0] : memref<8x256xf32, #tpu.memory_space<vmem>>, vector<8x256xf32>
    %1 = arith.truncf %0 : vector<8x256xf32> to vector<8x256xbf16>
    %c0_1 = arith.constant 0 : index
    %c0_2 = arith.constant 0 : index
    %2 = vector.load %arg1[%c0_1, %c0_2] : memref<256x512xbf16, #tpu.memory_space<vmem>>, vector<256x512xbf16>
    %cst = arith.constant dense<0.000000e+00> : vector<8x512xf32>
    %3 = tpu.matmul %1, %2, %cst {dimension_numbers = #tpu.dot_dimension_numbers<[1], [0], [0], [1], [0, 0, 1, 1], [], []>} : vector<8x256xbf16>, vector<256x512xbf16>, vector<8x512xf32> -> vector<8x512xf32>
    %c0_3 = arith.constant 0 : index
    %c0_4 = arith.constant 0 : index
    %4 = vector.load %arg2[%c0_3, %c0_4] : memref<1x512xf32, #tpu.memory_space<vmem>>, vector<1x512xf32>
    %5 = vector.broadcast %4 : vector<1x512xf32> to vector<8x512xf32>
    %6 = arith.addf %3, %5 : vector<8x512xf32>
    %cst_5 = arith.constant 0.000000e+00 : f32
    %7 = vector.broadcast %cst_5 : f32 to vector<8x512xf32>
    %8 = arith.maximumf %6, %7 : vector<8x512xf32>
    %9 = vector.extract_strided_slice %8 {offsets = [0, 0], sizes = [8, 256], strides = [1, 1]} : vector<8x512xf32> to vector<8x256xf32>
    %10 = vector.extract_strided_slice %8 {offsets = [0, 256], sizes = [8, 256], strides = [1, 1]} : vector<8x512xf32> to vector<8x256xf32>
    %11 = arith.truncf %9 : vector<8x256xf32> to vector<8x256xbf16>
    %c0_6 = arith.constant 0 : index
    %c0_7 = arith.constant 0 : index
    %12 = vector.load %arg3[%c0_6, %c0_7] : memref<256x256xbf16, #tpu.memory_space<vmem>>, vector<256x256xbf16>
    %cst_8 = arith.constant dense<0.000000e+00> : vector<8x256xf32>
    %13 = tpu.matmul %11, %12, %cst_8 {dimension_numbers = #tpu.dot_dimension_numbers<[1], [0], [0], [1], [0, 0, 1, 1], [], []>} : vector<8x256xbf16>, vector<256x256xbf16>, vector<8x256xf32> -> vector<8x256xf32>
    %c0_9 = arith.constant 0 : index
    %c0_10 = arith.constant 0 : index
    %14 = vector.load %arg4[%c0_9, %c0_10] : memref<1x256xf32, #tpu.memory_space<vmem>>, vector<1x256xf32>
    %15 = vector.broadcast %14 : vector<1x256xf32> to vector<8x256xf32>
    %16 = arith.addf %13, %15 : vector<8x256xf32>
    %cst_11 = arith.constant 0.000000e+00 : f32
    %17 = vector.broadcast %cst_11 : f32 to vector<8x256xf32>
    %18 = arith.maximumf %16, %17 : vector<8x256xf32>
    %19 = arith.truncf %18 : vector<8x256xf32> to vector<8x256xbf16>
    %c0_12 = arith.constant 0 : index
    %c0_13 = arith.constant 0 : index
    %20 = vector.load %arg5[%c0_12, %c0_13] : memref<256x128xbf16, #tpu.memory_space<vmem>>, vector<256x128xbf16>
    %cst_14 = arith.constant dense<0.000000e+00> : vector<8x128xf32>
    %21 = tpu.matmul %19, %20, %cst_14 {dimension_numbers = #tpu.dot_dimension_numbers<[1], [0], [0], [1], [0, 0, 1, 1], [], []>} : vector<8x256xbf16>, vector<256x128xbf16>, vector<8x128xf32> -> vector<8x128xf32>
    %c0_15 = arith.constant 0 : index
    %c0_16 = arith.constant 0 : index
    %22 = vector.load %arg6[%c0_15, %c0_16] : memref<1x128xf32, #tpu.memory_space<vmem>>, vector<1x128xf32>
    %23 = vector.broadcast %22 : vector<1x128xf32> to vector<8x128xf32>
    %24 = arith.addf %21, %23 : vector<8x128xf32>
    %c0_17 = arith.constant 0 : index
    %c0_18 = arith.constant 0 : index
    %25 = vector.load %arg11[%c0_17, %c0_18] : memref<8x128xf32, #tpu.memory_space<vmem>>, vector<8x128xf32>
    tpu.vector_store %arg11[%c0_17, %c0_18], %24 {strides = array<i32>} : memref<8x128xf32, #tpu.memory_space<vmem>>, vector<8x128xf32>,
    %26 = arith.truncf %10 : vector<8x256xf32> to vector<8x256xbf16>
    %c0_19 = arith.constant 0 : index
    %c0_20 = arith.constant 0 : index
    %27 = vector.load %arg7[%c0_19, %c0_20] : memref<256x256xbf16, #tpu.memory_space<vmem>>, vector<256x256xbf16>
    %cst_21 = arith.constant dense<0.000000e+00> : vector<8x256xf32>
    %28 = tpu.matmul %26, %27, %cst_21 {dimension_numbers = #tpu.dot_dimension_numbers<[1], [0], [0], [1], [0, 0, 1, 1], [], []>} : vector<8x256xbf16>, vector<256x256xbf16>, vector<8x256xf32> -> vector<8x256xf32>
    %c0_22 = arith.constant 0 : index
    %c0_23 = arith.constant 0 : index
    %29 = vector.load %arg8[%c0_22, %c0_23] : memref<1x256xf32, #tpu.memory_space<vmem>>, vector<1x256xf32>
    %30 = vector.broadcast %29 : vector<1x256xf32> to vector<8x256xf32>
    %31 = arith.addf %28, %30 : vector<8x256xf32>
    %cst_24 = arith.constant 0.000000e+00 : f32
    %32 = vector.broadcast %cst_24 : f32 to vector<8x256xf32>
    %33 = arith.maximumf %31, %32 : vector<8x256xf32>
    %34 = arith.truncf %33 : vector<8x256xf32> to vector<8x256xbf16>
    %c0_25 = arith.constant 0 : index
    %c0_26 = arith.constant 0 : index
    %35 = vector.load %arg9[%c0_25, %c0_26] : memref<256x256xbf16, #tpu.memory_space<vmem>>, vector<256x256xbf16>
    %cst_27 = arith.constant dense<0.000000e+00> : vector<8x256xf32>
    %36 = tpu.matmul %34, %35, %cst_27 {dimension_numbers = #tpu.dot_dimension_numbers<[1], [0], [0], [1], [0, 0, 1, 1], [], []>} : vector<8x256xbf16>, vector<256x256xbf16>, vector<8x256xf32> -> vector<8x256xf32>
    %c0_28 = arith.constant 0 : index
    %c0_29 = arith.constant 0 : index
    %37 = vector.load %arg10[%c0_28, %c0_29] : memref<1x256xf32, #tpu.memory_space<vmem>>, vector<1x256xf32>
    %38 = vector.broadcast %37 : vector<1x256xf32> to vector<8x256xf32>
    %39 = arith.addf %36, %38 : vector<8x256xf32>
    %c0_30 = arith.constant 0 : index
    %c0_31 = arith.constant 0 : index
    %40 = vector.load %arg12[%c0_30, %c0_31] : memref<8x256xf32, #tpu.memory_space<vmem>>, vector<8x256xf32>
    tpu.vector_store %arg12[%c0_30, %c0_31], %39 {strides = array<i32>} : memref<8x256xf32, #tpu.memory_space<vmem>>, vector<8x256xf32>,
    return
  }
}

</mosaic_0001>

<llo_original>
// kernel: decoder_forward.1
$region0: #{decoder_forward.1}
  #allocation0 [shape = 'u32[]', space=smem, size = 0x4, offset = 0x4, fixed_abs, tag = 'smem constant byte address 0x4 - core index']
  #allocation1 [shape = 'u32[144,128]{1,0:T(1,128)}', space=vmem, size = 0x12000, scoped, tag = 'internal scratch']
  %s0 = inlined_call_operand.vmem [shape: f32[8,256], index: 0, kind: input, shape index: {}]
  %s1 = inlined_call_operand.vmem [shape: bf16[256,512], index: 1, kind: input, shape index: {}]
  %s2 = inlined_call_operand.vmem [shape: f32[1,512], index: 2, kind: input, shape index: {}]
  %s3 = inlined_call_operand.vmem [shape: bf16[256,256], index: 3, kind: input, shape index: {}]
  %s4 = inlined_call_operand.vmem [shape: f32[1,256], index: 4, kind: input, shape index: {}]
  %s5 = inlined_call_operand.vmem [shape: bf16[256,128], index: 5, kind: input, shape index: {}]
  %s6 = inlined_call_operand.vmem [shape: f32[1,128], index: 6, kind: input, shape index: {}]
  %s7 = inlined_call_operand.vmem [shape: bf16[256,256], index: 7, kind: input, shape index: {}]
  %s8 = inlined_call_operand.vmem [shape: f32[1,256], index: 8, kind: input, shape index: {}]
  %s9 = inlined_call_operand.vmem [shape: bf16[256,256], index: 9, kind: input, shape index: {}]
  %s10 = inlined_call_operand.vmem [shape: f32[1,256], index: 10, kind: input, shape index: {}]
  %s11 = inlined_call_operand.hbm [shape: f32[8,128], index: 11, kind: output, shape index: {0}]
  %s12 = inlined_call_operand.hbm [shape: f32[8,256], index: 12, kind: output, shape index: {1}]
  %13 = xla_tuple %s11, %s12
  %s14 = sld [smem:[#allocation0]]
  $region62: #{decoder_forward.1} parent=0
    _
  %s16 = ssub.s32 1, %s14
  %s17 = scalar_select 0, %s16, %s14
  $region1: #{decoder_forward.1} parent=0
    #allocation2 [shape = 'u8[4096]{0}', space=vmem, size = 0x1000, scoped, tag = 'output window, operand 0, single buffered']
    #allocation3 [shape = 's32[1]{0}', space=sflag, size = 0x4, scoped, tag = 'scoped memory for decoder_forward.1']
    #allocation4 [shape = 'u8[8192]{0}', space=vmem, size = 0x2000, scoped, tag = 'output window, operand 1, single buffered']
    #allocation5 [shape = 's32[1]{0}', space=sflag, size = 0x4, scoped, tag = 'scoped memory for decoder_forward.1']
    %18 = vsyncpa [#allocation3], 0
    %19 = vsyncpa [#allocation5], 0
    // Predicated region
    $region2: #{decoder_forward.1} parent=1 // pred_check
      _
    $region3: #{decoder_forward.1} parent=1 // pred_check_branch
      %21 = sbr.rel (0) target = $region5
    $region4: #{decoder_forward.1} parent=1 // pred_region
      _
    $region5: #{decoder_forward.1} parent=1 // pred_fallthru
      _
    // Predicated region
    $region6: #{decoder_forward.1} parent=1 // pred_check
      _
    $region7: #{decoder_forward.1} parent=1 // pred_check_branch
      %23 = sbr.rel (0) target = $region9
    $region8: #{decoder_forward.1} parent=1 // pred_region
      _
    $region9: #{decoder_forward.1} parent=1 // pred_fallthru
      _
    // Predicated region
    $region10: #{decoder_forward.1} parent=1 // pred_check
      _
    $region11: #{decoder_forward.1} parent=1 // pred_check_branch
      %25 = sbr.rel (0) target = $region13
    $region12: #{decoder_forward.1} parent=1 // pred_region
      _
    $region13: #{decoder_forward.1} parent=1 // pred_fallthru
      _
    // Predicated region
    $region14: #{decoder_forward.1} parent=1 // pred_check
      _
    $region15: #{decoder_forward.1} parent=1 // pred_check_branch
      %27 = sbr.rel (0) target = $region17
    $region16: #{decoder_forward.1} parent=1 // pred_region
      _
    $region17: #{decoder_forward.1} parent=1 // pred_fallthru
      _
    // Predicated region
    $region18: #{decoder_forward.1} parent=1 // pred_check
      _
    $region19: #{decoder_forward.1} parent=1 // pred_check_branch
      %29 = sbr.rel (0) target = $region21
    $region20: #{decoder_forward.1} parent=1 // pred_region
      _
    $region21: #{decoder_forward.1} parent=1 // pred_fallthru
      _
    // Predicated region
    $region22: #{decoder_forward.1} parent=1 // pred_check
      _
    $region23: #{decoder_forward.1} parent=1 // pred_check_branch
      %31 = sbr.rel (0) target = $region25
    $region24: #{decoder_forward.1} parent=1 // pred_region
      _
    $region25: #{decoder_forward.1} parent=1 // pred_fallthru
      _
    // Predicated region
    $region26: #{decoder_forward.1} parent=1 // pred_check
      _
    $region27: #{decoder_forward.1} parent=1 // pred_check_branch
      %33 = sbr.rel (0) target = $region29
    $region28: #{decoder_forward.1} parent=1 // pred_region
      _
    $region29: #{decoder_forward.1} parent=1 // pred_fallthru
      _
    // Predicated region
    $region30: #{decoder_forward.1} parent=1 // pred_check
      _
    $region31: #{decoder_forward.1} parent=1 // pred_check_branch
      %35 = sbr.rel (0) target = $region33
    $region32: #{decoder_forward.1} parent=1 // pred_region
      _
    $region33: #{decoder_forward.1} parent=1 // pred_fallthru
      _
    // Predicated region
    $region34: #{decoder_forward.1} parent=1 // pred_check
      _
    $region35: #{decoder_forward.1} parent=1 // pred_check_branch
      %37 = sbr.rel (0) target = $region37
    $region36: #{decoder_forward.1} parent=1 // pred_region
      _
    $region37: #{decoder_forward.1} parent=1 // pred_fallthru
      _
    // Predicated region
    $region38: #{decoder_forward.1} parent=1 // pred_check
      _
    $region39: #{decoder_forward.1} parent=1 // pred_check_branch
      %39 = sbr.rel (0) target = $region41
    $region40: #{decoder_forward.1} parent=1 // pred_region
      _
    $region41: #{decoder_forward.1} parent=1 // pred_fallthru
      _
    // Predicated region
    $region42: #{decoder_forward.1} parent=1 // pred_check
      _
    $region43: #{decoder_forward.1} parent=1 // pred_check_branch
      %41 = sbr.rel (0) target = $region45
    $region44: #{decoder_forward.1} parent=1 // pred_region
      _
    $region45: #{decoder_forward.1} parent=1 // pred_fallthru
      _
    %v43 = vld [vmem:[%s0] sm:$0xff]
    %v44 = vld [vmem:[%s0 + $0x8] sm:$0xff]
    %v45 = vpack.c.bf16 %v43, %v43
    %v46 = vpack.c.bf16 %v44, %v44
    %v47 = vld [vmem:[%s1] sm:$0xff]
    %v48 = vld [vmem:[%s1 + $0x8] sm:$0xff]
    %v49 = vld [vmem:[%s1 + $0x10] sm:$0xff]
    %v50 = vld [vmem:[%s1 + $0x18] sm:$0xff]
    %v51 = vld [vmem:[%s1 + $0x20] sm:$0xff]
    %v52 = vld [vmem:[%s1 + $0x28] sm:$0xff]
    %v53 = vld [vmem:[%s1 + $0x30] sm:$0xff]
    %v54 = vld [vmem:[%s1 + $0x38] sm:$0xff]
    %v55 = vld [vmem:[%s1 + $0x40] sm:$0xff]
    %v56 = vld [vmem:[%s1 + $0x48] sm:$0xff]
    %v57 = vld [vmem:[%s1 + $0x50] sm:$0xff]
    %v58 = vld [vmem:[%s1 + $0x58] sm:$0xff]
    %v59 = vld [vmem:[%s1 + $0x60] sm:$0xff]
    %v60 = vld [vmem:[%s1 + $0x68] sm:$0xff]
    %v61 = vld [vmem:[%s1 + $0x70] sm:$0xff]
    %v62 = vld [vmem:[%s1 + $0x78] sm:$0xff]
    %v63 = vld [vmem:[%s1 + $0x80] sm:$0xff]
    %v64 = vld [vmem:[%s1 + $0x88] sm:$0xff]
    %v65 = vld [vmem:[%s1 + $0x90] sm:$0xff]
    %v66 = vld [vmem:[%s1 + $0x98] sm:$0xff]
    %v67 = vld [vmem:[%s1 + $0xa0] sm:$0xff]
    %v68 = vld [vmem:[%s1 + $0xa8] sm:$0xff]
    %v69 = vld [vmem:[%s1 + $0xb0] sm:$0xff]
    %v70 = vld [vmem:[%s1 + $0xb8] sm:$0xff]
    %v71 = vld [vmem:[%s1 + $0xc0] sm:$0xff]
    %v72 = vld [vmem:[%s1 + $0xc8] sm:$0xff]
    %v73 = vld [vmem:[%s1 + $0xd0] sm:$0xff]
    %v74 = vld [vmem:[%s1 + $0xd8] sm:$0xff]
    %v75 = vld [vmem:[%s1 + $0xe0] sm:$0xff]
    %v76 = vld [vmem:[%s1 + $0xe8] sm:$0xff]
    %v77 = vld [vmem:[%s1 + $0xf0] sm:$0xff]
    %v78 = vld [vmem:[%s1 + $0xf8] sm:$0xff]
    %v79 = vld [vmem:[%s1 + $0x100] sm:$0xff]
    %v80 = vld [vmem:[%s1 + $0x108] sm:$0xff]
    %v81 = vld [vmem:[%s1 + $0x110] sm:$0xff]
    %v82 = vld [vmem:[%s1 + $0x118] sm:$0xff]
    %v83 = vld [vmem:[%s1 + $0x120] sm:$0xff]
    %v84 = vld [vmem:[%s1 + $0x128] sm:$0xff]
    %v85 = vld [vmem:[%s1 + $0x130] sm:$0xff]
    %v86 = vld [vmem:[%s1 + $0x138] sm:$0xff]
    %v87 = vld [vmem:[%s1 + $0x140] sm:$0xff]
    %v88 = vld [vmem:[%s1 + $0x148] sm:$0xff]
    %v89 = vld [vmem:[%s1 + $0x150] sm:$0xff]
    %v90 = vld [vmem:[%s1 + $0x158] sm:$0xff]
    %v91 = vld [vmem:[%s1 + $0x160] sm:$0xff]
    %v92 = vld [vmem:[%s1 + $0x168] sm:$0xff]
    %v93 = vld [vmem:[%s1 + $0x170] sm:$0xff]
    %v94 = vld [vmem:[%s1 + $0x178] sm:$0xff]
    %v95 = vld [vmem:[%s1 + $0x180] sm:$0xff]
    %v96 = vld [vmem:[%s1 + $0x188] sm:$0xff]
    %v97 = vld [vmem:[%s1 + $0x190] sm:$0xff]
    %v98 = vld [vmem:[%s1 + $0x198] sm:$0xff]
    %v99 = vld [vmem:[%s1 + $0x1a0] sm:$0xff]
    %v100 = vld [vmem:[%s1 + $0x1a8] sm:$0xff]
    %v101 = vld [vmem:[%s1 + $0x1b0] sm:$0xff]
    %v102 = vld [vmem:[%s1 + $0x1b8] sm:$0xff]
    %v103 = vld [vmem:[%s1 + $0x1c0] sm:$0xff]
    %v104 = vld [vmem:[%s1 + $0x1c8] sm:$0xff]
    %v105 = vld [vmem:[%s1 + $0x1d0] sm:$0xff]
    %v106 = vld [vmem:[%s1 + $0x1d8] sm:$0xff]
    %v107 = vld [vmem:[%s1 + $0x1e0] sm:$0xff]
    %v108 = vld [vmem:[%s1 + $0x1e8] sm:$0xff]
    %v109 = vld [vmem:[%s1 + $0x1f0] sm:$0xff]
    %v110 = vld [vmem:[%s1 + $0x1f8] sm:$0xff]
    %v111 = vld [vmem:[%s2] sm:$0xf]
    %v113 = vlaneseq
    %v114 = vshrl.u32 %v113, 7
    %v115 = vsub.s32 0, %v114
    %v116 = vrot.slane %v111, %v115
    %v117 = vlaneseq
    %v118 = vshrl.u32 %v117, 7
    %v119 = vsub.s32 1, %v118
    %v120 = vrot.slane %v111, %v119
    %v121 = vlaneseq
    %v122 = vshrl.u32 %v121, 7
    %v123 = vsub.s32 2, %v122
    %v124 = vrot.slane %v111, %v123
    %v125 = vlaneseq
    %v126 = vshrl.u32 %v125, 7
    %v127 = vsub.s32 3, %v126
    %v128 = vrot.slane %v111, %v127
    %v197 = vunpack.c.l.b16 %v47
    %v198 = vunpack.c.h.b16 %v47
    %v199 = vunpack.c.l.b16 %v48
    %v200 = vunpack.c.h.b16 %v48
    %v201 = vunpack.c.l.b16 %v49
    %v202 = vunpack.c.h.b16 %v49
    %v203 = vunpack.c.l.b16 %v50
    %v204 = vunpack.c.h.b16 %v50
    %v205 = vunpack.c.l.b16 %v51
    %v206 = vunpack.c.h.b16 %v51
    %v207 = vunpack.c.l.b16 %v52
    %v208 = vunpack.c.h.b16 %v52
    %v209 = vunpack.c.l.b16 %v53
    %v210 = vunpack.c.h.b16 %v53
    %v211 = vunpack.c.l.b16 %v54
    %v212 = vunpack.c.h.b16 %v54
    %v213 = vunpack.c.l.b16 %v55
    %v214 = vunpack.c.h.b16 %v55
    %v215 = vunpack.c.l.b16 %v56
    %v216 = vunpack.c.h.b16 %v56
    %v217 = vunpack.c.l.b16 %v57
    %v218 = vunpack.c.h.b16 %v57
    %v219 = vunpack.c.l.b16 %v58
    %v220 = vunpack.c.h.b16 %v58
    %v221 = vunpack.c.l.b16 %v59
    %v222 = vunpack.c.h.b16 %v59
    %v223 = vunpack.c.l.b16 %v60
    %v224 = vunpack.c.h.b16 %v60
    %v225 = vunpack.c.l.b16 %v61
    %v226 = vunpack.c.h.b16 %v61
    %v227 = vunpack.c.l.b16 %v62
    %v228 = vunpack.c.h.b16 %v62
    %v229 = vunpack.c.l.b16 %v63
    %v230 = vunpack.c.h.b16 %v63
    %v231 = vunpack.c.l.b16 %v64
    %v232 = vunpack.c.h.b16 %v64
    %v233 = vunpack.c.l.b16 %v65
    %v234 = vunpack.c.h.b16 %v65
    %v235 = vunpack.c.l.b16 %v66
    %v236 = vunpack.c.h.b16 %v66
    %v237 = vunpack.c.l.b16 %v67
    %v238 = vunpack.c.h.b16 %v67
    %v239 = vunpack.c.l.b16 %v68
    %v240 = vunpack.c.h.b16 %v68
    %v241 = vunpack.c.l.b16 %v69
    %v242 = vunpack.c.h.b16 %v69
    %v243 = vunpack.c.l.b16 %v70
    %v244 = vunpack.c.h.b16 %v70
    %v245 = vunpack.c.l.b16 %v71
    %v246 = vunpack.c.h.b16 %v71
    %v247 = vunpack.c.l.b16 %v72
    %v248 = vunpack.c.h.b16 %v72
    %v249 = vunpack.c.l.b16 %v73
    %v250 = vunpack.c.h.b16 %v73
    %v251 = vunpack.c.l.b16 %v74
    %v252 = vunpack.c.h.b16 %v74
    %v253 = vunpack.c.l.b16 %v75
    %v254 = vunpack.c.h.b16 %v75
    %v255 = vunpack.c.l.b16 %v76
    %v256 = vunpack.c.h.b16 %v76
    %v257 = vunpack.c.l.b16 %v77
    %v258 = vunpack.c.h.b16 %v77
    %v259 = vunpack.c.l.b16 %v78
    %v260 = vunpack.c.h.b16 %v78
    %v261 = vunpack.c.l.b16 %v79
    %v262 = vunpack.c.h.b16 %v79
    %v263 = vunpack.c.l.b16 %v80
    %v264 = vunpack.c.h.b16 %v80
    %v265 = vunpack.c.l.b16 %v81
    %v266 = vunpack.c.h.b16 %v81
    %v267 = vunpack.c.l.b16 %v82
    %v268 = vunpack.c.h.b16 %v82
    %v269 = vunpack.c.l.b16 %v83
    %v270 = vunpack.c.h.b16 %v83
    %v271 = vunpack.c.l.b16 %v84
    %v272 = vunpack.c.h.b16 %v84
    %v273 = vunpack.c.l.b16 %v85
    %v274 = vunpack.c.h.b16 %v85
    %v275 = vunpack.c.l.b16 %v86
    %v276 = vunpack.c.h.b16 %v86
    %v277 = vunpack.c.l.b16 %v87
    %v278 = vunpack.c.h.b16 %v87
    %v279 = vunpack.c.l.b16 %v88
    %v280 = vunpack.c.h.b16 %v88
    %v281 = vunpack.c.l.b16 %v89
    %v282 = vunpack.c.h.b16 %v89
    %v283 = vunpack.c.l.b16 %v90
    %v284 = vunpack.c.h.b16 %v90
    %v285 = vunpack.c.l.b16 %v91
    %v286 = vunpack.c.h.b16 %v91
    %v287 = vunpack.c.l.b16 %v92
    %v288 = vunpack.c.h.b16 %v92
    %v289 = vunpack.c.l.b16 %v93
    %v290 = vunpack.c.h.b16 %v93
    %v291 = vunpack.c.l.b16 %v94
    %v292 = vunpack.c.h.b16 %v94
    %v293 = vunpack.c.l.b16 %v95
    %v294 = vunpack.c.h.b16 %v95
    %v295 = vunpack.c.l.b16 %v96
    %v296 = vunpack.c.h.b16 %v96
    %v297 = vunpack.c.l.b16 %v97
    %v298 = vunpack.c.h.b16 %v97
    %v299 = vunpack.c.l.b16 %v98
    %v300 = vunpack.c.h.b16 %v98
    %v301 = vunpack.c.l.b16 %v99
    %v302 = vunpack.c.h.b16 %v99
    %v303 = vunpack.c.l.b16 %v100
    %v304 = vunpack.c.h.b16 %v100
    %v305 = vunpack.c.l.b16 %v101
    %v306 = vunpack.c.h.b16 %v101
    %v307 = vunpack.c.l.b16 %v102
    %v308 = vunpack.c.h.b16 %v102
    %v309 = vunpack.c.l.b16 %v103
    %v310 = vunpack.c.h.b16 %v103
    %v311 = vunpack.c.l.b16 %v104
    %v312 = vunpack.c.h.b16 %v104
    %v313 = vunpack.c.l.b16 %v105
    %v314 = vunpack.c.h.b16 %v105
    %v315 = vunpack.c.l.b16 %v106
    %v316 = vunpack.c.h.b16 %v106
    %v317 = vunpack.c.l.b16 %v107
    %v318 = vunpack.c.h.b16 %v107
    %v319 = vunpack.c.l.b16 %v108
    %v320 = vunpack.c.h.b16 %v108
    %v321 = vunpack.c.l.b16 %v109
    %v322 = vunpack.c.h.b16 %v109
    %v323 = vunpack.c.l.b16 %v110
    %v324 = vunpack.c.h.b16 %v110
    %v325 = vpack.c.b16 %v201, %v197
    %v326 = vpack.c.b16 %v202, %v198
    %v327 = vpack.c.b16 %v203, %v199
    %v328 = vpack.c.b16 %v204, %v200
    %v329 = vpack.c.b16 %v209, %v205
    %v330 = vpack.c.b16 %v210, %v206
    %v331 = vpack.c.b16 %v211, %v207
    %v332 = vpack.c.b16 %v212, %v208
    %v333 = vpack.c.b16 %v217, %v213
    %v334 = vpack.c.b16 %v218, %v214
    %v335 = vpack.c.b16 %v219, %v215
    %v336 = vpack.c.b16 %v220, %v216
    %v337 = vpack.c.b16 %v225, %v221
    %v338 = vpack.c.b16 %v226, %v222
    %v339 = vpack.c.b16 %v227, %v223
    %v340 = vpack.c.b16 %v228, %v224
    %v341 = vpack.c.b16 %v233, %v229
    %v342 = vpack.c.b16 %v234, %v230
    %v343 = vpack.c.b16 %v235, %v231
    %v344 = vpack.c.b16 %v236, %v232
    %v345 = vpack.c.b16 %v241, %v237
    %v346 = vpack.c.b16 %v242, %v238
    %v347 = vpack.c.b16 %v243, %v239
    %v348 = vpack.c.b16 %v244, %v240
    %v349 = vpack.c.b16 %v249, %v245
    %v350 = vpack.c.b16 %v250, %v246
    %v351 = vpack.c.b16 %v251, %v247
    %v352 = vpack.c.b16 %v252, %v248
    %v353 = vpack.c.b16 %v257, %v253
    %v354 = vpack.c.b16 %v258, %v254
    %v355 = vpack.c.b16 %v259, %v255
    %v356 = vpack.c.b16 %v260, %v256
    %v357 = vpack.c.b16 %v265, %v261
    %v358 = vpack.c.b16 %v266, %v262
    %v359 = vpack.c.b16 %v267, %v263
    %v360 = vpack.c.b16 %v268, %v264
    %v361 = vpack.c.b16 %v273, %v269
    %v362 = vpack.c.b16 %v274, %v270
    %v363 = vpack.c.b16 %v275, %v271
    %v364 = vpack.c.b16 %v276, %v272
    %v365 = vpack.c.b16 %v281, %v277
    %v366 = vpack.c.b16 %v282, %v278
    %v367 = vpack.c.b16 %v283, %v279
    %v368 = vpack.c.b16 %v284, %v280
    %v369 = vpack.c.b16 %v289, %v285
    %v370 = vpack.c.b16 %v290, %v286
    %v371 = vpack.c.b16 %v291, %v287
    %v372 = vpack.c.b16 %v292, %v288
    %v373 = vpack.c.b16 %v297, %v293
    %v374 = vpack.c.b16 %v298, %v294
    %v375 = vpack.c.b16 %v299, %v295
    %v376 = vpack.c.b16 %v300, %v296
    %v377 = vpack.c.b16 %v305, %v301
    %v378 = vpack.c.b16 %v306, %v302
    %v379 = vpack.c.b16 %v307, %v303
    %v380 = vpack.c.b16 %v308, %v304
    %v381 = vpack.c.b16 %v313, %v309
    %v382 = vpack.c.b16 %v314, %v310
    %v383 = vpack.c.b16 %v315, %v311
    %v384 = vpack.c.b16 %v316, %v312
    %v385 = vpack.c.b16 %v321, %v317
    %v386 = vpack.c.b16 %v322, %v318
    %v387 = vpack.c.b16 %v323, %v319
    %v388 = vpack.c.b16 %v324, %v320
    %453 = vmatprep.subr.bf16.mxu0 %v326
    %454 = vmatpush1.bf16.msra.mxu0 %v325
    %455 = vmatprep.subr.bf16.mxu0 %v330
    %456 = vmatpush1.bf16.msra.mxu0 %v329
    %457 = vmatprep.subr.bf16.mxu0 %v334
    %458 = vmatpush1.bf16.msra.mxu0 %v333
    %459 = vmatprep.subr.bf16.mxu0 %v338
    %460 = vmatpush1.bf16.msra.mxu0 %v337
    %461 = vmatprep.subr.bf16.mxu0 %v342
    %462 = vmatpush1.bf16.msra.mxu0 %v341
    %463 = vmatprep.subr.bf16.mxu0 %v346
    %464 = vmatpush1.bf16.msra.mxu0 %v345
    %465 = vmatprep.subr.bf16.mxu0 %v350
    %466 = vmatpush1.bf16.msra.mxu0 %v349
    %467 = vmatprep.subr.bf16.mxu0 %v354
    %468 = vmatpush1.bf16.msra.mxu0 %v353
    %469 = vmatprep.subr.bf16.mxu0 %v358
    %470 = vmatpush1.bf16.msra.mxu0 %v357
    %471 = vmatprep.subr.bf16.mxu0 %v362
    %472 = vmatpush1.bf16.msra.mxu0 %v361
    %473 = vmatprep.subr.bf16.mxu0 %v366
    %474 = vmatpush1.bf16.msra.mxu0 %v365
    %475 = vmatprep.subr.bf16.mxu0 %v370
    %476 = vmatpush1.bf16.msra.mxu0 %v369
    %477 = vmatprep.subr.bf16.mxu0 %v374
    %478 = vmatpush1.bf16.msra.mxu0 %v373
    %479 = vmatprep.subr.bf16.mxu0 %v378
    %480 = vmatpush1.bf16.msra.mxu0 %v377
    %481 = vmatprep.subr.bf16.mxu0 %v382
    %482 = vmatpush1.bf16.msra.mxu0 %v381
    %483 = vmatprep.subr.bf16.mxu0 %v386
    %484 = vmatpush1.bf16.msra.mxu0 %v385
    %485 = vmatprep.mubr.bf16.mxu0 %v46
    %486 = vmatmul.mubr.bf16.gmra.mrb[0].mxu0 %v45
    %v487 = vpop.f32.mrb[0].mxu0
    %v488 = vadd.f32 %v116, %v487
    %v489 = vpop.f32.mrb[0].mxu0
    %v490 = vadd.f32 %v120, %v489
    %v491 = vpop.f32.mrb[0].mxu0
    %v492 = vpop.f32.mrb[0].mxu0
    %493 = vdwg.mxu0
    %494 = vmatprep.subr.bf16.mxu0 %v328
    %495 = vmatpush1.bf16.msra.mxu0 %v327
    %496 = vmatprep.subr.bf16.mxu0 %v332
    %497 = vmatpush1.bf16.msra.mxu0 %v331
    %498 = vmatprep.subr.bf16.mxu0 %v336
    %499 = vmatpush1.bf16.msra.mxu0 %v335
    %500 = vmatprep.subr.bf16.mxu0 %v340
    %501 = vmatpush1.bf16.msra.mxu0 %v339
    %502 = vmatprep.subr.bf16.mxu0 %v344
    %503 = vmatpush1.bf16.msra.mxu0 %v343
    %504 = vmatprep.subr.bf16.mxu0 %v348
    %505 = vmatpush1.bf16.msra.mxu0 %v347
    %506 = vmatprep.subr.bf16.mxu0 %v352
    %507 = vmatpush1.bf16.msra.mxu0 %v351
    %508 = vmatprep.subr.bf16.mxu0 %v356
    %509 = vmatpush1.bf16.msra.mxu0 %v355
    %510 = vmatprep.subr.bf16.mxu0 %v360
    %511 = vmatpush1.bf16.msra.mxu0 %v359
    %512 = vmatprep.subr.bf16.mxu0 %v364
    %513 = vmatpush1.bf16.msra.mxu0 %v363
    %514 = vmatprep.subr.bf16.mxu0 %v368
    %515 = vmatpush1.bf16.msra.mxu0 %v367
    %516 = vmatprep.subr.bf16.mxu0 %v372
    %517 = vmatpush1.bf16.msra.mxu0 %v371
    %518 = vmatprep.subr.bf16.mxu0 %v376
    %519 = vmatpush1.bf16.msra.mxu0 %v375
    %520 = vmatprep.subr.bf16.mxu0 %v380
    %521 = vmatpush1.bf16.msra.mxu0 %v379
    %522 = vmatprep.subr.bf16.mxu0 %v384
    %523 = vmatpush1.bf16.msra.mxu0 %v383
    %524 = vmatprep.subr.bf16.mxu0 %v388
    %525 = vmatpush1.bf16.msra.mxu0 %v387
    %526 = vmatprep.mubr.bf16.mxu0 %v46
    %527 = vmatmul.mubr.bf16.gmra.mrb[0].mxu0 %v45
    %v528 = vpop.f32.mrb[0].mxu0
    %v529 = vadd.f32 %v124, %v528
    %v530 = vpop.f32.mrb[0].mxu0
    %v531 = vadd.f32 %v128, %v530
    %v532 = vpop.f32.mrb[0].mxu0
    %v533 = vpop.f32.mrb[0].mxu0
    %534 = vdwg.mxu0
    %v535 = vmax.f32 %v488, 0.0
    %v536 = vmax.f32 %v490, 0.0
    %v537 = vmax.f32 %v529, 0.0
    %v538 = vmax.f32 %v531, 0.0
    %v539 = vpack.c.bf16 %v535, %v535
    %v540 = vpack.c.bf16 %v536, %v536
    %v541 = vld [vmem:[%s3] sm:$0xff]
    %v542 = vld [vmem:[%s3 + $0x8] sm:$0xff]
    %v543 = vld [vmem:[%s3 + $0x10] sm:$0xff]
    %v544 = vld [vmem:[%s3 + $0x18] sm:$0xff]
    %v545 = vld [vmem:[%s3 + $0x20] sm:$0xff]
    %v546 = vld [vmem:[%s3 + $0x28] sm:$0xff]
    %v547 = vld [vmem:[%s3 + $0x30] sm:$0xff]
    %v548 = vld [vmem:[%s3 + $0x38] sm:$0xff]
    %v549 = vld [vmem:[%s3 + $0x40] sm:$0xff]
    %v550 = vld [vmem:[%s3 + $0x48] sm:$0xff]
    %v551 = vld [vmem:[%s3 + $0x50] sm:$0xff]
    %v552 = vld [vmem:[%s3 + $0x58] sm:$0xff]
    %v553 = vld [vmem:[%s3 + $0x60] sm:$0xff]
    %v554 = vld [vmem:[%s3 + $0x68] sm:$0xff]
    %v555 = vld [vmem:[%s3 + $0x70] sm:$0xff]
    %v556 = vld [vmem:[%s3 + $0x78] sm:$0xff]
    %v557 = vld [vmem:[%s3 + $0x80] sm:$0xff]
    %v558 = vld [vmem:[%s3 + $0x88] sm:$0xff]
    %v559 = vld [vmem:[%s3 + $0x90] sm:$0xff]
    %v560 = vld [vmem:[%s3 + $0x98] sm:$0xff]
    %v561 = vld [vmem:[%s3 + $0xa0] sm:$0xff]
    %v562 = vld [vmem:[%s3 + $0xa8] sm:$0xff]
    %v563 = vld [vmem:[%s3 + $0xb0] sm:$0xff]
    %v564 = vld [vmem:[%s3 + $0xb8] sm:$0xff]
    %v565 = vld [vmem:[%s3 + $0xc0] sm:$0xff]
    %v566 = vld [vmem:[%s3 + $0xc8] sm:$0xff]
    %v567 = vld [vmem:[%s3 + $0xd0] sm:$0xff]
    %v568 = vld [vmem:[%s3 + $0xd8] sm:$0xff]
    %v569 = vld [vmem:[%s3 + $0xe0] sm:$0xff]
    %v570 = vld [vmem:[%s3 + $0xe8] sm:$0xff]
    %v571 = vld [vmem:[%s3 + $0xf0] sm:$0xff]
    %v572 = vld [vmem:[%s3 + $0xf8] sm:$0xff]
    %v573 = vld [vmem:[%s4] sm:$0x3]
    %v575 = vlaneseq
    %v576 = vshrl.u32 %v575, 7
    %v577 = vsub.s32 0, %v576
    %v578 = vrot.slane %v573, %v577
    %v579 = vlaneseq
    %v580 = vshrl.u32 %v579, 7
    %v581 = vsub.s32 1, %v580
    %v582 = vrot.slane %v573, %v581
    %v617 = vunpack.c.l.b16 %v541
    %v618 = vunpack.c.h.b16 %v541
    %v619 = vunpack.c.l.b16 %v542
    %v620 = vunpack.c.h.b16 %v542
    %v621 = vunpack.c.l.b16 %v543
    %v622 = vunpack.c.h.b16 %v543
    %v623 = vunpack.c.l.b16 %v544
    %v624 = vunpack.c.h.b16 %v544
    %v625 = vunpack.c.l.b16 %v545
    %v626 = vunpack.c.h.b16 %v545
    %v627 = vunpack.c.l.b16 %v546
    %v628 = vunpack.c.h.b16 %v546
    %v629 = vunpack.c.l.b16 %v547
    %v630 = vunpack.c.h.b16 %v547
    %v631 = vunpack.c.l.b16 %v548
    %v632 = vunpack.c.h.b16 %v548
    %v633 = vunpack.c.l.b16 %v549
    %v634 = vunpack.c.h.b16 %v549
    %v635 = vunpack.c.l.b16 %v550
    %v636 = vunpack.c.h.b16 %v550
    %v637 = vunpack.c.l.b16 %v551
    %v638 = vunpack.c.h.b16 %v551
    %v639 = vunpack.c.l.b16 %v552
    %v640 = vunpack.c.h.b16 %v552
    %v641 = vunpack.c.l.b16 %v553
    %v642 = vunpack.c.h.b16 %v553
    %v643 = vunpack.c.l.b16 %v554
    %v644 = vunpack.c.h.b16 %v554
    %v645 = vunpack.c.l.b16 %v555
    %v646 = vunpack.c.h.b16 %v555
    %v647 = vunpack.c.l.b16 %v556
    %v648 = vunpack.c.h.b16 %v556
    %v649 = vunpack.c.l.b16 %v557
    %v650 = vunpack.c.h.b16 %v557
    %v651 = vunpack.c.l.b16 %v558
    %v652 = vunpack.c.h.b16 %v558
    %v653 = vunpack.c.l.b16 %v559
    %v654 = vunpack.c.h.b16 %v559
    %v655 = vunpack.c.l.b16 %v560
    %v656 = vunpack.c.h.b16 %v560
    %v657 = vunpack.c.l.b16 %v561
    %v658 = vunpack.c.h.b16 %v561
    %v659 = vunpack.c.l.b16 %v562
    %v660 = vunpack.c.h.b16 %v562
    %v661 = vunpack.c.l.b16 %v563
    %v662 = vunpack.c.h.b16 %v563
    %v663 = vunpack.c.l.b16 %v564
    %v664 = vunpack.c.h.b16 %v564
    %v665 = vunpack.c.l.b16 %v565
    %v666 = vunpack.c.h.b16 %v565
    %v667 = vunpack.c.l.b16 %v566
    %v668 = vunpack.c.h.b16 %v566
    %v669 = vunpack.c.l.b16 %v567
    %v670 = vunpack.c.h.b16 %v567
    %v671 = vunpack.c.l.b16 %v568
    %v672 = vunpack.c.h.b16 %v568
    %v673 = vunpack.c.l.b16 %v569
    %v674 = vunpack.c.h.b16 %v569
    %v675 = vunpack.c.l.b16 %v570
    %v676 = vunpack.c.h.b16 %v570
    %v677 = vunpack.c.l.b16 %v571
    %v678 = vunpack.c.h.b16 %v571
    %v679 = vunpack.c.l.b16 %v572
    %v680 = vunpack.c.h.b16 %v572
    %v681 = vpack.c.b16 %v619, %v617
    %v682 = vpack.c.b16 %v620, %v618
    %v683 = vpack.c.b16 %v623, %v621
    %v684 = vpack.c.b16 %v624, %v622
    %v685 = vpack.c.b16 %v627, %v625
    %v686 = vpack.c.b16 %v628, %v626
    %v687 = vpack.c.b16 %v631, %v629
    %v688 = vpack.c.b16 %v632, %v630
    %v689 = vpack.c.b16 %v635, %v633
    %v690 = vpack.c.b16 %v636, %v634
    %v691 = vpack.c.b16 %v639, %v637
    %v692 = vpack.c.b16 %v640, %v638
    %v693 = vpack.c.b16 %v643, %v641
    %v694 = vpack.c.b16 %v644, %v642
    %v695 = vpack.c.b16 %v647, %v645
    %v696 = vpack.c.b16 %v648, %v646
    %v697 = vpack.c.b16 %v651, %v649
    %v698 = vpack.c.b16 %v652, %v650
    %v699 = vpack.c.b16 %v655, %v653
    %v700 = vpack.c.b16 %v656, %v654
    %v701 = vpack.c.b16 %v659, %v657
    %v702 = vpack.c.b16 %v660, %v658
    %v703 = vpack.c.b16 %v663, %v661
    %v704 = vpack.c.b16 %v664, %v662
    %v705 = vpack.c.b16 %v667, %v665
    %v706 = vpack.c.b16 %v668, %v666
    %v707 = vpack.c.b16 %v671, %v669
    %v708 = vpack.c.b16 %v672, %v670
    %v709 = vpack.c.b16 %v675, %v673
    %v710 = vpack.c.b16 %v676, %v674
    %v711 = vpack.c.b16 %v679, %v677
    %v712 = vpack.c.b16 %v680, %v678
    %745 = vmatprep.subr.bf16.mxu0 %v682
    %746 = vmatpush1.bf16.msra.mxu0 %v681
    %747 = vmatprep.subr.bf16.mxu0 %v684
    %748 = vmatpush1.bf16.msra.mxu0 %v683
    %749 = vmatprep.subr.bf16.mxu0 %v686
    %750 = vmatpush1.bf16.msra.mxu0 %v685
    %751 = vmatprep.subr.bf16.mxu0 %v688
    %752 = vmatpush1.bf16.msra.mxu0 %v687
    %753 = vmatprep.subr.bf16.mxu0 %v690
    %754 = vmatpush1.bf16.msra.mxu0 %v689
    %755 = vmatprep.subr.bf16.mxu0 %v692
    %756 = vmatpush1.bf16.msra.mxu0 %v691
    %757 = vmatprep.subr.bf16.mxu0 %v694
    %758 = vmatpush1.bf16.msra.mxu0 %v693
    %759 = vmatprep.subr.bf16.mxu0 %v696
    %760 = vmatpush1.bf16.msra.mxu0 %v695
    %761 = vmatprep.subr.bf16.mxu0 %v698
    %762 = vmatpush1.bf16.msra.mxu0 %v697
    %763 = vmatprep.subr.bf16.mxu0 %v700
    %764 = vmatpush1.bf16.msra.mxu0 %v699
    %765 = vmatprep.subr.bf16.mxu0 %v702
    %766 = vmatpush1.bf16.msra.mxu0 %v701
    %767 = vmatprep.subr.bf16.mxu0 %v704
    %768 = vmatpush1.bf16.msra.mxu0 %v703
    %769 = vmatprep.subr.bf16.mxu0 %v706
    %770 = vmatpush1.bf16.msra.mxu0 %v705
    %771 = vmatprep.subr.bf16.mxu0 %v708
    %772 = vmatpush1.bf16.msra.mxu0 %v707
    %773 = vmatprep.subr.bf16.mxu0 %v710
    %774 = vmatpush1.bf16.msra.mxu0 %v709
    %775 = vmatprep.subr.bf16.mxu0 %v712
    %776 = vmatpush1.bf16.msra.mxu0 %v711
    %777 = vmatprep.mubr.bf16.mxu0 %v540
    %778 = vmatmul.mubr.bf16.gmra.mrb[0].mxu0 %v539
    %v779 = vpop.f32.mrb[0].mxu0
    %v780 = vadd.f32 %v578, %v779
    %v781 = vpop.f32.mrb[0].mxu0
    %v782 = vadd.f32 %v582, %v781
    %v783 = vpop.f32.mrb[0].mxu0
    %v784 = vpop.f32.mrb[0].mxu0
    %785 = vdwg.mxu0
    %v786 = vmax.f32 %v780, 0.0
    %v787 = vmax.f32 %v782, 0.0
    %v788 = vpack.c.bf16 %v786, %v786
    %v789 = vpack.c.bf16 %v787, %v787
    %v790 = vld [vmem:[%s5] sm:$0xf]
    %v791 = vld [vmem:[%s5 + $0x4] sm:$0xf]
    %v792 = vld [vmem:[%s5 + $0x8] sm:$0xf]
    %v793 = vld [vmem:[%s5 + $0xc] sm:$0xf]
    %v794 = vld [vmem:[%s5 + $0x10] sm:$0xf]
    %v795 = vld [vmem:[%s5 + $0x14] sm:$0xf]
    %v796 = vld [vmem:[%s5 + $0x18] sm:$0xf]
    %v797 = vld [vmem:[%s5 + $0x1c] sm:$0xf]
    %v798 = vld [vmem:[%s5 + $0x20] sm:$0xf]
    %v799 = vld [vmem:[%s5 + $0x24] sm:$0xf]
    %v800 = vld [vmem:[%s5 + $0x28] sm:$0xf]
    %v801 = vld [vmem:[%s5 + $0x2c] sm:$0xf]
    %v802 = vld [vmem:[%s5 + $0x30] sm:$0xf]
    %v803 = vld [vmem:[%s5 + $0x34] sm:$0xf]
    %v804 = vld [vmem:[%s5 + $0x38] sm:$0xf]
    %v805 = vld [vmem:[%s5 + $0x3c] sm:$0xf]
    %v806 = vld [vmem:[%s5 + $0x40] sm:$0xf]
    %v807 = vld [vmem:[%s5 + $0x44] sm:$0xf]
    %v808 = vld [vmem:[%s5 + $0x48] sm:$0xf]
    %v809 = vld [vmem:[%s5 + $0x4c] sm:$0xf]
    %v810 = vld [vmem:[%s5 + $0x50] sm:$0xf]
    %v811 = vld [vmem:[%s5 + $0x54] sm:$0xf]
    %v812 = vld [vmem:[%s5 + $0x58] sm:$0xf]
    %v813 = vld [vmem:[%s5 + $0x5c] sm:$0xf]
    %v814 = vld [vmem:[%s5 + $0x60] sm:$0xf]
    %v815 = vld [vmem:[%s5 + $0x64] sm:$0xf]
    %v816 = vld [vmem:[%s5 + $0x68] sm:$0xf]
    %v817 = vld [vmem:[%s5 + $0x6c] sm:$0xf]
    %v818 = vld [vmem:[%s5 + $0x70] sm:$0xf]
    %v819 = vld [vmem:[%s5 + $0x74] sm:$0xf]
    %v820 = vld [vmem:[%s5 + $0x78] sm:$0xf]
    %v821 = vld [vmem:[%s5 + $0x7c] sm:$0xf]
    %v822 = vld [vmem:[%s6] sm:$0x1]
    %v824 = vlaneseq
    %v825 = vshrl.u32 %v824, 7
    %v826 = vsub.s32 0, %v825
    %v827 = vrot.slane %v822, %v826
    %v861 = vunpack.c.l.b16 %v790
    %v862 = vunpack.c.l.b16 %v791
    %v863 = vunpack.c.l.b16 %v792
    %v864 = vunpack.c.l.b16 %v793
    %v865 = vunpack.c.l.b16 %v794
    %v866 = vunpack.c.l.b16 %v795
    %v867 = vunpack.c.l.b16 %v796
    %v868 = vunpack.c.l.b16 %v797
    %v869 = vunpack.c.l.b16 %v798
    %v870 = vunpack.c.l.b16 %v799
    %v871 = vunpack.c.l.b16 %v800
    %v872 = vunpack.c.l.b16 %v801
    %v873 = vunpack.c.l.b16 %v802
    %v874 = vunpack.c.l.b16 %v803
    %v875 = vunpack.c.l.b16 %v804
    %v876 = vunpack.c.l.b16 %v805
    %v877 = vunpack.c.l.b16 %v806
    %v878 = vunpack.c.l.b16 %v807
    %v879 = vunpack.c.l.b16 %v808
    %v880 = vunpack.c.l.b16 %v809
    %v881 = vunpack.c.l.b16 %v810
    %v882 = vunpack.c.l.b16 %v811
    %v883 = vunpack.c.l.b16 %v812
    %v884 = vunpack.c.l.b16 %v813
    %v885 = vunpack.c.l.b16 %v814
    %v886 = vunpack.c.l.b16 %v815
    %v887 = vunpack.c.l.b16 %v816
    %v888 = vunpack.c.l.b16 %v817
    %v889 = vunpack.c.l.b16 %v818
    %v890 = vunpack.c.l.b16 %v819
    %v891 = vunpack.c.l.b16 %v820
    %v892 = vunpack.c.l.b16 %v821
    %v893 = vpack.c.b16 %v862, %v861
    %v894 = vpack.c.b16 %v864, %v863
    %v895 = vpack.c.b16 %v866, %v865
    %v896 = vpack.c.b16 %v868, %v867
    %v897 = vpack.c.b16 %v870, %v869
    %v898 = vpack.c.b16 %v872, %v871
    %v899 = vpack.c.b16 %v874, %v873
    %v900 = vpack.c.b16 %v876, %v875
    %v901 = vpack.c.b16 %v878, %v877
    %v902 = vpack.c.b16 %v880, %v879
    %v903 = vpack.c.b16 %v882, %v881
    %v904 = vpack.c.b16 %v884, %v883
    %v905 = vpack.c.b16 %v886, %v885
    %v906 = vpack.c.b16 %v888, %v887
    %v907 = vpack.c.b16 %v890, %v889
    %v908 = vpack.c.b16 %v892, %v891
    %925 = vmatprep.subr.bf16.mxu0 0
    %926 = vmatpush1.bf16.msra.mxu0 %v893
    %927 = vmatprep.subr.bf16.mxu0 0
    %928 = vmatpush1.bf16.msra.mxu0 %v894
    %929 = vmatprep.subr.bf16.mxu0 0
    %930 = vmatpush1.bf16.msra.mxu0 %v895
    %931 = vmatprep.subr.bf16.mxu0 0
    %932 = vmatpush1.bf16.msra.mxu0 %v896
    %933 = vmatprep.subr.bf16.mxu0 0
    %934 = vmatpush1.bf16.msra.mxu0 %v897
    %935 = vmatprep.subr.bf16.mxu0 0
    %936 = vmatpush1.bf16.msra.mxu0 %v898
    %937 = vmatprep.subr.bf16.mxu0 0
    %938 = vmatpush1.bf16.msra.mxu0 %v899
    %939 = vmatprep.subr.bf16.mxu0 0
    %940 = vmatpush1.bf16.msra.mxu0 %v900
    %941 = vmatprep.subr.bf16.mxu0 0
    %942 = vmatpush1.bf16.msra.mxu0 %v901
    %943 = vmatprep.subr.bf16.mxu0 0
    %944 = vmatpush1.bf16.msra.mxu0 %v902
    %945 = vmatprep.subr.bf16.mxu0 0
    %946 = vmatpush1.bf16.msra.mxu0 %v903
    %947 = vmatprep.subr.bf16.mxu0 0
    %948 = vmatpush1.bf16.msra.mxu0 %v904
    %949 = vmatprep.subr.bf16.mxu0 0
    %950 = vmatpush1.bf16.msra.mxu0 %v905
    %951 = vmatprep.subr.bf16.mxu0 0
    %952 = vmatpush1.bf16.msra.mxu0 %v906
    %953 = vmatprep.subr.bf16.mxu0 0
    %954 = vmatpush1.bf16.msra.mxu0 %v907
    %955 = vmatprep.subr.bf16.mxu0 0
    %956 = vmatpush1.bf16.msra.mxu0 %v908
    %957 = vmatprep.mubr.bf16.mxu0 %v789
    %958 = vmatmul.mubr.bf16.gmra.mrb[0].mxu0 %v788
    %v959 = vpop.f32.mrb[0].mxu0
    %v960 = vadd.f32 %v827, %v959
    %v961 = vpop.f32.mrb[0].mxu0
    %v962 = vpop.f32.mrb[0].mxu0
    %v963 = vpop.f32.mrb[0].mxu0
    %964 = vdwg.mxu0
    %965 = vst [vmem:[#allocation2] sm:$0xff] %v960
    %v966 = vpack.c.bf16 %v537, %v537
    %v967 = vpack.c.bf16 %v538, %v538
    %v968 = vld [vmem:[%s7] sm:$0xff]
    %v969 = vld [vmem:[%s7 + $0x8] sm:$0xff]
    %v970 = vld [vmem:[%s7 + $0x10] sm:$0xff]
    %v971 = vld [vmem:[%s7 + $0x18] sm:$0xff]
    %v972 = vld [vmem:[%s7 + $0x20] sm:$0xff]
    %v973 = vld [vmem:[%s7 + $0x28] sm:$0xff]
    %v974 = vld [vmem:[%s7 + $0x30] sm:$0xff]
    %v975 = vld [vmem:[%s7 + $0x38] sm:$0xff]
    %v976 = vld [vmem:[%s7 + $0x40] sm:$0xff]
    %v977 = vld [vmem:[%s7 + $0x48] sm:$0xff]
    %v978 = vld [vmem:[%s7 + $0x50] sm:$0xff]
    %v979 = vld [vmem:[%s7 + $0x58] sm:$0xff]
    %v980 = vld [vmem:[%s7 + $0x60] sm:$0xff]
    %v981 = vld [vmem:[%s7 + $0x68] sm:$0xff]
    %v982 = vld [vmem:[%s7 + $0x70] sm:$0xff]
    %v983 = vld [vmem:[%s7 + $0x78] sm:$0xff]
    %v984 = vld [vmem:[%s7 + $0x80] sm:$0xff]
    %v985 = vld [vmem:[%s7 + $0x88] sm:$0xff]
    %v986 = vld [vmem:[%s7 + $0x90] sm:$0xff]
    %v987 = vld [vmem:[%s7 + $0x98] sm:$0xff]
    %v988 = vld [vmem:[%s7 + $0xa0] sm:$0xff]
    %v989 = vld [vmem:[%s7 + $0xa8] sm:$0xff]
    %v990 = vld [vmem:[%s7 + $0xb0] sm:$0xff]
    %v991 = vld [vmem:[%s7 + $0xb8] sm:$0xff]
    %v992 = vld [vmem:[%s7 + $0xc0] sm:$0xff]
    %v993 = vld [vmem:[%s7 + $0xc8] sm:$0xff]
    %v994 = vld [vmem:[%s7 + $0xd0] sm:$0xff]
    %v995 = vld [vmem:[%s7 + $0xd8] sm:$0xff]
    %v996 = vld [vmem:[%s7 + $0xe0] sm:$0xff]
    %v997 = vld [vmem:[%s7 + $0xe8] sm:$0xff]
    %v998 = vld [vmem:[%s7 + $0xf0] sm:$0xff]
    %v999 = vld [vmem:[%s7 + $0xf8] sm:$0xff]
    %v1000 = vld [vmem:[%s8] sm:$0x3]
    %v1002 = vlaneseq
    %v1003 = vshrl.u32 %v1002, 7
    %v1004 = vsub.s32 0, %v1003
    %v1005 = vrot.slane %v1000, %v1004
    %v1006 = vlaneseq
    %v1007 = vshrl.u32 %v1006, 7
    %v1008 = vsub.s32 1, %v1007
    %v1009 = vrot.slane %v1000, %v1008
    %v1044 = vunpack.c.l.b16 %v968
    %v1045 = vunpack.c.h.b16 %v968
    %v1046 = vunpack.c.l.b16 %v969
    %v1047 = vunpack.c.h.b16 %v969
    %v1048 = vunpack.c.l.b16 %v970
    %v1049 = vunpack.c.h.b16 %v970
    %v1050 = vunpack.c.l.b16 %v971
    %v1051 = vunpack.c.h.b16 %v971
    %v1052 = vunpack.c.l.b16 %v972
    %v1053 = vunpack.c.h.b16 %v972
    %v1054 = vunpack.c.l.b16 %v973
    %v1055 = vunpack.c.h.b16 %v973
    %v1056 = vunpack.c.l.b16 %v974
    %v1057 = vunpack.c.h.b16 %v974
    %v1058 = vunpack.c.l.b16 %v975
    %v1059 = vunpack.c.h.b16 %v975
    %v1060 = vunpack.c.l.b16 %v976
    %v1061 = vunpack.c.h.b16 %v976
    %v1062 = vunpack.c.l.b16 %v977
    %v1063 = vunpack.c.h.b16 %v977
    %v1064 = vunpack.c.l.b16 %v978
    %v1065 = vunpack.c.h.b16 %v978
    %v1066 = vunpack.c.l.b16 %v979
    %v1067 = vunpack.c.h.b16 %v979
    %v1068 = vunpack.c.l.b16 %v980
    %v1069 = vunpack.c.h.b16 %v980
    %v1070 = vunpack.c.l.b16 %v981
    %v1071 = vunpack.c.h.b16 %v981
    %v1072 = vunpack.c.l.b16 %v982
    %v1073 = vunpack.c.h.b16 %v982
    %v1074 = vunpack.c.l.b16 %v983
    %v1075 = vunpack.c.h.b16 %v983
    %v1076 = vunpack.c.l.b16 %v984
    %v1077 = vunpack.c.h.b16 %v984
    %v1078 = vunpack.c.l.b16 %v985
    %v1079 = vunpack.c.h.b16 %v985
    %v1080 = vunpack.c.l.b16 %v986
    %v1081 = vunpack.c.h.b16 %v986
    %v1082 = vunpack.c.l.b16 %v987
    %v1083 = vunpack.c.h.b16 %v987
    %v1084 = vunpack.c.l.b16 %v988
    %v1085 = vunpack.c.h.b16 %v988
    %v1086 = vunpack.c.l.b16 %v989
    %v1087 = vunpack.c.h.b16 %v989
    %v1088 = vunpack.c.l.b16 %v990
    %v1089 = vunpack.c.h.b16 %v990
    %v1090 = vunpack.c.l.b16 %v991
    %v1091 = vunpack.c.h.b16 %v991
    %v1092 = vunpack.c.l.b16 %v992
    %v1093 = vunpack.c.h.b16 %v992
    %v1094 = vunpack.c.l.b16 %v993
    %v1095 = vunpack.c.h.b16 %v993
    %v1096 = vunpack.c.l.b16 %v994
    %v1097 = vunpack.c.h.b16 %v994
    %v1098 = vunpack.c.l.b16 %v995
    %v1099 = vunpack.c.h.b16 %v995
    %v1100 = vunpack.c.l.b16 %v996
    %v1101 = vunpack.c.h.b16 %v996
    %v1102 = vunpack.c.l.b16 %v997
    %v1103 = vunpack.c.h.b16 %v997
    %v1104 = vunpack.c.l.b16 %v998
    %v1105 = vunpack.c.h.b16 %v998
    %v1106 = vunpack.c.l.b16 %v999
    %v1107 = vunpack.c.h.b16 %v999
    %v1108 = vpack.c.b16 %v1046, %v1044
    %v1109 = vpack.c.b16 %v1047, %v1045
    %v1110 = vpack.c.b16 %v1050, %v1048
    %v1111 = vpack.c.b16 %v1051, %v1049
    %v1112 = vpack.c.b16 %v1054, %v1052
    %v1113 = vpack.c.b16 %v1055, %v1053
    %v1114 = vpack.c.b16 %v1058, %v1056
    %v1115 = vpack.c.b16 %v1059, %v1057
    %v1116 = vpack.c.b16 %v1062, %v1060
    %v1117 = vpack.c.b16 %v1063, %v1061
    %v1118 = vpack.c.b16 %v1066, %v1064
    %v1119 = vpack.c.b16 %v1067, %v1065
    %v1120 = vpack.c.b16 %v1070, %v1068
    %v1121 = vpack.c.b16 %v1071, %v1069
    %v1122 = vpack.c.b16 %v1074, %v1072
    %v1123 = vpack.c.b16 %v1075, %v1073
    %v1124 = vpack.c.b16 %v1078, %v1076
    %v1125 = vpack.c.b16 %v1079, %v1077
    %v1126 = vpack.c.b16 %v1082, %v1080
    %v1127 = vpack.c.b16 %v1083, %v1081
    %v1128 = vpack.c.b16 %v1086, %v1084
    %v1129 = vpack.c.b16 %v1087, %v1085
    %v1130 = vpack.c.b16 %v1090, %v1088
    %v1131 = vpack.c.b16 %v1091, %v1089
    %v1132 = vpack.c.b16 %v1094, %v1092
    %v1133 = vpack.c.b16 %v1095, %v1093
    %v1134 = vpack.c.b16 %v1098, %v1096
    %v1135 = vpack.c.b16 %v1099, %v1097
    %v1136 = vpack.c.b16 %v1102, %v1100
    %v1137 = vpack.c.b16 %v1103, %v1101
    %v1138 = vpack.c.b16 %v1106, %v1104
    %v1139 = vpack.c.b16 %v1107, %v1105
    %1172 = vmatprep.subr.bf16.mxu0 %v1109
    %1173 = vmatpush1.bf16.msra.mxu0 %v1108
    %1174 = vmatprep.subr.bf16.mxu0 %v1111
    %1175 = vmatpush1.bf16.msra.mxu0 %v1110
    %1176 = vmatprep.subr.bf16.mxu0 %v1113
    %1177 = vmatpush1.bf16.msra.mxu0 %v1112
    %1178 = vmatprep.subr.bf16.mxu0 %v1115
    %1179 = vmatpush1.bf16.msra.mxu0 %v1114
    %1180 = vmatprep.subr.bf16.mxu0 %v1117
    %1181 = vmatpush1.bf16.msra.mxu0 %v1116
    %1182 = vmatprep.subr.bf16.mxu0 %v1119
    %1183 = vmatpush1.bf16.msra.mxu0 %v1118
    %1184 = vmatprep.subr.bf16.mxu0 %v1121
    %1185 = vmatpush1.bf16.msra.mxu0 %v1120
    %1186 = vmatprep.subr.bf16.mxu0 %v1123
    %1187 = vmatpush1.bf16.msra.mxu0 %v1122
    %1188 = vmatprep.subr.bf16.mxu0 %v1125
    %1189 = vmatpush1.bf16.msra.mxu0 %v1124
    %1190 = vmatprep.subr.bf16.mxu0 %v1127
    %1191 = vmatpush1.bf16.msra.mxu0 %v1126
    %1192 = vmatprep.subr.bf16.mxu0 %v1129
    %1193 = vmatpush1.bf16.msra.mxu0 %v1128
    %1194 = vmatprep.subr.bf16.mxu0 %v1131
    %1195 = vmatpush1.bf16.msra.mxu0 %v1130
    %1196 = vmatprep.subr.bf16.mxu0 %v1133
    %1197 = vmatpush1.bf16.msra.mxu0 %v1132
    %1198 = vmatprep.subr.bf16.mxu0 %v1135
    %1199 = vmatpush1.bf16.msra.mxu0 %v1134
    %1200 = vmatprep.subr.bf16.mxu0 %v1137
    %1201 = vmatpush1.bf16.msra.mxu0 %v1136
    %1202 = vmatprep.subr.bf16.mxu0 %v1139
    %1203 = vmatpush1.bf16.msra.mxu0 %v1138
    %1204 = vmatprep.mubr.bf16.mxu0 %v967
    %1205 = vmatmul.mubr.bf16.gmra.mrb[0].mxu0 %v966
    %v1206 = vpop.f32.mrb[0].mxu0
    %v1207 = vadd.f32 %v1005, %v1206
    %v1208 = vpop.f32.mrb[0].mxu0
    %v1209 = vadd.f32 %v1009, %v1208
    %v1210 = vpop.f32.mrb[0].mxu0
    %v1211 = vpop.f32.mrb[0].mxu0
    %1212 = vdwg.mxu0
    %v1213 = vmax.f32 %v1207, 0.0
    %v1214 = vmax.f32 %v1209, 0.0
    %v1215 = vpack.c.bf16 %v1213, %v1213
    %v1216 = vpack.c.bf16 %v1214, %v1214
    %v1217 = vld [vmem:[%s9] sm:$0xff]
    %v1218 = vld [vmem:[%s9 + $0x8] sm:$0xff]
    %v1219 = vld [vmem:[%s9 + $0x10] sm:$0xff]
    %v1220 = vld [vmem:[%s9 + $0x18] sm:$0xff]
    %v1221 = vld [vmem:[%s9 + $0x20] sm:$0xff]
    %v1222 = vld [vmem:[%s9 + $0x28] sm:$0xff]
    %v1223 = vld [vmem:[%s9 + $0x30] sm:$0xff]
    %v1224 = vld [vmem:[%s9 + $0x38] sm:$0xff]
    %v1225 = vld [vmem:[%s9 + $0x40] sm:$0xff]
    %v1226 = vld [vmem:[%s9 + $0x48] sm:$0xff]
    %v1227 = vld [vmem:[%s9 + $0x50] sm:$0xff]
    %v1228 = vld [vmem:[%s9 + $0x58] sm:$0xff]
    %v1229 = vld [vmem:[%s9 + $0x60] sm:$0xff]
    %v1230 = vld [vmem:[%s9 + $0x68] sm:$0xff]
    %v1231 = vld [vmem:[%s9 + $0x70] sm:$0xff]
    %v1232 = vld [vmem:[%s9 + $0x78] sm:$0xff]
    %v1233 = vld [vmem:[%s9 + $0x80] sm:$0xff]
    %v1234 = vld [vmem:[%s9 + $0x88] sm:$0xff]
    %v1235 = vld [vmem:[%s9 + $0x90] sm:$0xff]
    %v1236 = vld [vmem:[%s9 + $0x98] sm:$0xff]
    %v1237 = vld [vmem:[%s9 + $0xa0] sm:$0xff]
    %v1238 = vld [vmem:[%s9 + $0xa8] sm:$0xff]
    %v1239 = vld [vmem:[%s9 + $0xb0] sm:$0xff]
    %v1240 = vld [vmem:[%s9 + $0xb8] sm:$0xff]
    %v1241 = vld [vmem:[%s9 + $0xc0] sm:$0xff]
    %v1242 = vld [vmem:[%s9 + $0xc8] sm:$0xff]
    %v1243 = vld [vmem:[%s9 + $0xd0] sm:$0xff]
    %v1244 = vld [vmem:[%s9 + $0xd8] sm:$0xff]
    %v1245 = vld [vmem:[%s9 + $0xe0] sm:$0xff]
    %v1246 = vld [vmem:[%s9 + $0xe8] sm:$0xff]
    %v1247 = vld [vmem:[%s9 + $0xf0] sm:$0xff]
    %v1248 = vld [vmem:[%s9 + $0xf8] sm:$0xff]
    %v1249 = vld [vmem:[%s10] sm:$0x3]
    %v1251 = vlaneseq
    %v1252 = vshrl.u32 %v1251, 7
    %v1253 = vsub.s32 0, %v1252
    %v1254 = vrot.slane %v1249, %v1253
    %v1255 = vlaneseq
    %v1256 = vshrl.u32 %v1255, 7
    %v1257 = vsub.s32 1, %v1256
    %v1258 = vrot.slane %v1249, %v1257
    %v1293 = vunpack.c.l.b16 %v1217
    %v1294 = vunpack.c.h.b16 %v1217
    %v1295 = vunpack.c.l.b16 %v1218
    %v1296 = vunpack.c.h.b16 %v1218
    %v1297 = vunpack.c.l.b16 %v1219
    %v1298 = vunpack.c.h.b16 %v1219
    %v1299 = vunpack.c.l.b16 %v1220
    %v1300 = vunpack.c.h.b16 %v1220
    %v1301 = vunpack.c.l.b16 %v1221
    %v1302 = vunpack.c.h.b16 %v1221
    %v1303 = vunpack.c.l.b16 %v1222
    %v1304 = vunpack.c.h.b16 %v1222
    %v1305 = vunpack.c.l.b16 %v1223
    %v1306 = vunpack.c.h.b16 %v1223
    %v1307 = vunpack.c.l.b16 %v1224
    %v1308 = vunpack.c.h.b16 %v1224
    %v1309 = vunpack.c.l.b16 %v1225
    %v1310 = vunpack.c.h.b16 %v1225
    %v1311 = vunpack.c.l.b16 %v1226
    %v1312 = vunpack.c.h.b16 %v1226
    %v1313 = vunpack.c.l.b16 %v1227
    %v1314 = vunpack.c.h.b16 %v1227
    %v1315 = vunpack.c.l.b16 %v1228
    %v1316 = vunpack.c.h.b16 %v1228
    %v1317 = vunpack.c.l.b16 %v1229
    %v1318 = vunpack.c.h.b16 %v1229
    %v1319 = vunpack.c.l.b16 %v1230
    %v1320 = vunpack.c.h.b16 %v1230
    %v1321 = vunpack.c.l.b16 %v1231
    %v1322 = vunpack.c.h.b16 %v1231
    %v1323 = vunpack.c.l.b16 %v1232
    %v1324 = vunpack.c.h.b16 %v1232
    %v1325 = vunpack.c.l.b16 %v1233
    %v1326 = vunpack.c.h.b16 %v1233
    %v1327 = vunpack.c.l.b16 %v1234
    %v1328 = vunpack.c.h.b16 %v1234
    %v1329 = vunpack.c.l.b16 %v1235
    %v1330 = vunpack.c.h.b16 %v1235
    %v1331 = vunpack.c.l.b16 %v1236
    %v1332 = vunpack.c.h.b16 %v1236
    %v1333 = vunpack.c.l.b16 %v1237
    %v1334 = vunpack.c.h.b16 %v1237
    %v1335 = vunpack.c.l.b16 %v1238
    %v1336 = vunpack.c.h.b16 %v1238
    %v1337 = vunpack.c.l.b16 %v1239
    %v1338 = vunpack.c.h.b16 %v1239
    %v1339 = vunpack.c.l.b16 %v1240
    %v1340 = vunpack.c.h.b16 %v1240
    %v1341 = vunpack.c.l.b16 %v1241
    %v1342 = vunpack.c.h.b16 %v1241
    %v1343 = vunpack.c.l.b16 %v1242
    %v1344 = vunpack.c.h.b16 %v1242
    %v1345 = vunpack.c.l.b16 %v1243
    %v1346 = vunpack.c.h.b16 %v1243
    %v1347 = vunpack.c.l.b16 %v1244
    %v1348 = vunpack.c.h.b16 %v1244
    %v1349 = vunpack.c.l.b16 %v1245
    %v1350 = vunpack.c.h.b16 %v1245
    %v1351 = vunpack.c.l.b16 %v1246
    %v1352 = vunpack.c.h.b16 %v1246
    %v1353 = vunpack.c.l.b16 %v1247
    %v1354 = vunpack.c.h.b16 %v1247
    %v1355 = vunpack.c.l.b16 %v1248
    %v1356 = vunpack.c.h.b16 %v1248
    %v1357 = vpack.c.b16 %v1295, %v1293
    %v1358 = vpack.c.b16 %v1296, %v1294
    %v1359 = vpack.c.b16 %v1299, %v1297
    %v1360 = vpack.c.b16 %v1300, %v1298
    %v1361 = vpack.c.b16 %v1303, %v1301
    %v1362 = vpack.c.b16 %v1304, %v1302
    %v1363 = vpack.c.b16 %v1307, %v1305
    %v1364 = vpack.c.b16 %v1308, %v1306
    %v1365 = vpack.c.b16 %v1311, %v1309
    %v1366 = vpack.c.b16 %v1312, %v1310
    %v1367 = vpack.c.b16 %v1315, %v1313
    %v1368 = vpack.c.b16 %v1316, %v1314
    %v1369 = vpack.c.b16 %v1319, %v1317
    %v1370 = vpack.c.b16 %v1320, %v1318
    %v1371 = vpack.c.b16 %v1323, %v1321
    %v1372 = vpack.c.b16 %v1324, %v1322
    %v1373 = vpack.c.b16 %v1327, %v1325
    %v1374 = vpack.c.b16 %v1328, %v1326
    %v1375 = vpack.c.b16 %v1331, %v1329
    %v1376 = vpack.c.b16 %v1332, %v1330
    %v1377 = vpack.c.b16 %v1335, %v1333
    %v1378 = vpack.c.b16 %v1336, %v1334
    %v1379 = vpack.c.b16 %v1339, %v1337
    %v1380 = vpack.c.b16 %v1340, %v1338
    %v1381 = vpack.c.b16 %v1343, %v1341
    %v1382 = vpack.c.b16 %v1344, %v1342
    %v1383 = vpack.c.b16 %v1347, %v1345
    %v1384 = vpack.c.b16 %v1348, %v1346
    %v1385 = vpack.c.b16 %v1351, %v1349
    %v1386 = vpack.c.b16 %v1352, %v1350
    %v1387 = vpack.c.b16 %v1355, %v1353
    %v1388 = vpack.c.b16 %v1356, %v1354
    %1421 = vmatprep.subr.bf16.mxu0 %v1358
    %1422 = vmatpush1.bf16.msra.mxu0 %v1357
    %1423 = vmatprep.subr.bf16.mxu0 %v1360
    %1424 = vmatpush1.bf16.msra.mxu0 %v1359
    %1425 = vmatprep.subr.bf16.mxu0 %v1362
    %1426 = vmatpush1.bf16.msra.mxu0 %v1361
    %1427 = vmatprep.subr.bf16.mxu0 %v1364
    %1428 = vmatpush1.bf16.msra.mxu0 %v1363
    %1429 = vmatprep.subr.bf16.mxu0 %v1366
    %1430 = vmatpush1.bf16.msra.mxu0 %v1365
    %1431 = vmatprep.subr.bf16.mxu0 %v1368
    %1432 = vmatpush1.bf16.msra.mxu0 %v1367
    %1433 = vmatprep.subr.bf16.mxu0 %v1370
    %1434 = vmatpush1.bf16.msra.mxu0 %v1369
    %1435 = vmatprep.subr.bf16.mxu0 %v1372
    %1436 = vmatpush1.bf16.msra.mxu0 %v1371
    %1437 = vmatprep.subr.bf16.mxu0 %v1374
    %1438 = vmatpush1.bf16.msra.mxu0 %v1373
    %1439 = vmatprep.subr.bf16.mxu0 %v1376
    %1440 = vmatpush1.bf16.msra.mxu0 %v1375
    %1441 = vmatprep.subr.bf16.mxu0 %v1378
    %1442 = vmatpush1.bf16.msra.mxu0 %v1377
    %1443 = vmatprep.subr.bf16.mxu0 %v1380
    %1444 = vmatpush1.bf16.msra.mxu0 %v1379
    %1445 = vmatprep.subr.bf16.mxu0 %v1382
    %1446 = vmatpush1.bf16.msra.mxu0 %v1381
    %1447 = vmatprep.subr.bf16.mxu0 %v1384
    %1448 = vmatpush1.bf16.msra.mxu0 %v1383
    %1449 = vmatprep.subr.bf16.mxu0 %v1386
    %1450 = vmatpush1.bf16.msra.mxu0 %v1385
    %1451 = vmatprep.subr.bf16.mxu0 %v1388
    %1452 = vmatpush1.bf16.msra.mxu0 %v1387
    %1453 = vmatprep.mubr.bf16.mxu0 %v1216
    %1454 = vmatmul.mubr.bf16.gmra.mrb[0].mxu0 %v1215
    %v1455 = vpop.f32.mrb[0].mxu0
    %v1456 = vadd.f32 %v1254, %v1455
    %v1457 = vpop.f32.mrb[0].mxu0
    %v1458 = vadd.f32 %v1258, %v1457
    %v1459 = vpop.f32.mrb[0].mxu0
    %v1460 = vpop.f32.mrb[0].mxu0
    %1461 = vdwg.mxu0
    %1462 = vst [vmem:[#allocation4] sm:$0xff] %v1456
    %1463 = vst [vmem:[#allocation4 + $0x8] sm:$0xff] %v1458
    // Predicated region
    $region46: #{decoder_forward.1} parent=1 // pred_check
      _
    $region47: #{decoder_forward.1} parent=1 // pred_check_branch
      %1465 = sbr.rel (0) target = $region49
    $region48: #{decoder_forward.1} parent=1 // pred_region
      %s1467 = ssub.s32 128, 128
      %1468 = vsyncadd [#allocation3], %s1467
      %s1470 = sshll.u32 [#allocation2], 4
      %s1471 = int_to_ptr.vmem [resolvable:$true] %s1470
      %1473 = dma.vmem_to_hbm [thread:$0]  %s1471, 128, %s11, [#allocation3]
    $region49: #{decoder_forward.1} parent=1 // pred_fallthru
      _
    // Predicated region
    $region50: #{decoder_forward.1} parent=1 // pred_check
      _
    $region51: #{decoder_forward.1} parent=1 // pred_check_branch
      %1475 = sbr.rel (0) target = $region53
    $region52: #{decoder_forward.1} parent=1 // pred_region
      %s1477 = ssub.s32 256, 256
      %1478 = vsyncadd [#allocation5], %s1477
      %s1480 = sshll.u32 [#allocation4], 4
      %s1481 = int_to_ptr.vmem [resolvable:$true] %s1480
      %1483 = dma.vmem_to_hbm [thread:$0]  %s1481, 256, %s12, [#allocation5]
    $region53: #{decoder_forward.1} parent=1 // pred_fallthru
      _
    // Predicated region
    $region54: #{decoder_forward.1} parent=1 // pred_check
      _
    $region55: #{decoder_forward.1} parent=1 // pred_check_branch
      %1485 = sbr.rel (0) target = $region57
    $region56: #{decoder_forward.1} parent=1 // pred_region
      %1486 = dma.done [#allocation3], 128
    $region57: #{decoder_forward.1} parent=1 // pred_fallthru
      _
    // Predicated region
    $region58: #{decoder_forward.1} parent=1 // pred_check
      _
    $region59: #{decoder_forward.1} parent=1 // pred_check_branch
      %1488 = sbr.rel (0) target = $region61
    $region60: #{decoder_forward.1} parent=1 // pred_region
      %1489 = dma.done [#allocation5], 256
    $region61: #{decoder_forward.1} parent=1 // pred_fallthru
      _
    %1490 = vsyncpa [#allocation3], 1
    %1491 = vsyncpa [#allocation5], 1

</llo_original>
